<compile_context>
chip_gen: v6e
topology: v6e:2x2x1
jax: 0.10.0
libtpu: 0.0.40
codegen_flags: <defaults>
</compile_context>

<pallas_src>
import functools

import jax
import jax.numpy as jnp
from jax.experimental import pallas as pl
from jax.experimental.pallas import tpu as pltpu


# ---------------------------------------------------------------------------
# Kernels
# ---------------------------------------------------------------------------
def hopfield_kernel_fused(prev_ref, w_ref, b_ref, o_ref):
    """nk == 1: one MXU matmul per output tile, bias add + clamp fused."""
    acc = jnp.dot(prev_ref[...], w_ref[...], preferred_element_type=jnp.float32)
    o_ref[...] = jnp.clip(acc + b_ref[...], -1.0, 1.0)


def hopfield_kernel_ksplit(prev_ref, w_ref, b_ref, o_ref):
    """nk > 1: accumulate over the k grid axis directly into the VMEM-resident
    f32 output tile (no scratch); bias hoisted into the k == 0 init."""
    k = pl.program_id(2)

    @pl.when(k == 0)
    def _init():
        o_ref[...] = jnp.broadcast_to(b_ref[...], o_ref.shape)

    o_ref[...] += jnp.dot(
        prev_ref[...], w_ref[...], preferred_element_type=jnp.float32
    )

    @pl.when(k == pl.num_programs(2) - 1)
    def _finalize():
        o_ref[...] = jnp.clip(o_ref[...], -1.0, 1.0)  # torch.clamp(min=-1, max=1)


# ---------------------------------------------------------------------------
# Tile / VMEM selection
# ---------------------------------------------------------------------------
def _vmem_budget_and_limit():
    """(tile budget bytes, vmem_limit_bytes) from the physical VMEM size."""
    try:
        phys = int(pltpu.get_tpu_info().vmem_capacity_bytes)
    except Exception:
        phys = 64 << 20  # conservative fallback (v7x per-TC size)
    budget = min(phys * 3 // 4, 100 << 20)          # ~48 MiB v7x, ~96 MiB v5e/v6e
    limit = min(phys - (4 << 20), budget + (8 << 20))
    return budget, limit


def _tile_candidates(n, cap):
    """Multiples of 128 dividing n, <= cap, descending (fallback [128])."""
    cands = [d for d in range(128, min(n, cap) + 1, 128) if n % d == 0]
    return sorted(cands, reverse=True) or [min(n, 128)]


def _pick_tiles(N, budget):
    """Return (tm, tn, tk) for f32, assuming double buffering of every operand."""
    # Preferred: tk = tn = N  (single dot per row-block; prev->out alias kept).
    # bytes ~= 2*tm*N*4 (prev) + 2*N*N*4 (w) + 2*tm*N*4 (out)
    #       =  16*tm*N + 8*N*N
    if 8 * N * N < budget:
        tm_cap = (budget - 8 * N * N) // (16 * N)
        if tm_cap >= 128:
            tm = _tile_candidates(N, min(N, tm_cap))[0]
            # Megacore: ensure >= 2 "parallel" i blocks when possible.  Cheap
            # even on 1-TC chips here: w's block index is constant across i,
            # so the split does not re-stream w from HBM.
            if N // tm < 2 and N >= 256:
                smaller = _tile_candidates(N, N // 2)
                if smaller and smaller[0] >= 128:
                    tm = smaller[0]
            return tm, N, N

    # Fallback for very large N: square output tiles (minimise ni + nj, i.e.
    # redundant w/prev HBM re-reads), shrink tk before shrinking tm/tn.
    # bytes ~= 8 * (tm*tk + tk*tn + tm*tn) with tm == tn == t.
    for t in _tile_candidates(N, 2048):
        for tk in _tile_candidates(N, 2048):
            if 8 * (2 * t * tk + t * t) <= budget:
                return t, t, tk
    return 128, 128, 128


# ---------------------------------------------------------------------------
# Forward
# ---------------------------------------------------------------------------
@functools.partial(jax.jit, donate_argnums=(0,))
def hopfield_forward(prev, w, b):
    """out = clamp(prev @ w + b, -1, 1) via a tiled Pallas matmul kernel."""
    N, K = prev.shape
    K2, M = w.shape
    assert K == K2 and N == M and b.shape == (N,)
    assert N % 128 == 0, "in_features must be a multiple of 128 for this kernel"

    budget, vmem_limit = _vmem_budget_and_limit()
    tm, tn, tk = _pick_tiles(N, budget)
    ni, nj, nk = N // tm, N // tn, K // tk

    b2 = b.reshape(1, N)  # lane-dense (1, N) bias slab

    # In-place recurrence update: alias prev -> out ONLY when nj == 1.  Then
    # every prev tile of row-block i is fully consumed before the full-width
    # output row-block i is written back, so there is no read-after-write
    # hazard on the shared HBM buffer.  Never enable this with nj > 1.
    aliases = {0: 0} if nj == 1 else {}

    kernel = hopfield_kernel_fused if nk == 1 else hopfield_kernel_ksplit

    return pl.pallas_call(
        kernel,
        out_shape=jax.ShapeDtypeStruct((N, N), jnp.float32),
        grid_spec=pltpu.PrefetchScalarGridSpec(
            num_scalar_prefetch=0,
            grid=(ni, nj, nk),
            in_specs=[
                pl.BlockSpec((tm, tk), lambda i, j, k: (i, k)),   # prev
                pl.BlockSpec((tk, tn), lambda i, j, k: (k, j)),   # w
                pl.BlockSpec((1, tn), lambda i, j, k: (0, j)),    # b
            ],
            out_specs=pl.BlockSpec((tm, tn), lambda i, j, k: (i, j)),
        ),
        compiler_params=pltpu.CompilerParams(
            dimension_semantics=("parallel", "parallel", "arbitrary"),
            vmem_limit_bytes=int(vmem_limit),
        ),
        input_output_aliases=aliases,
    )(prev, w, b2)


class HopfieldLayer:
    """JAX/Pallas port of the PyTorch HopfieldLayer module."""

    def __init__(self, in_features):
        # The torch module inits w/b/prev to zeros; prev is set via set_init_value.
        self.w = jnp.zeros((in_features, in_features), dtype=jnp.float32)
        self.b = jnp.zeros((in_features,), dtype=jnp.float32)
        self.prev = jnp.zeros((in_features, in_features), dtype=jnp.float32)

    def set_init_value(self, value):
        self.prev = jnp.asarray(value, dtype=jnp.float32)

    def forward(self, input=0):
        # hopfield_forward donates `prev`; the old state buffer is reused in
        # place for the new state (via input_output_aliases when nj == 1).
        out = hopfield_forward(self.prev, self.w, self.b)
        self.prev = out
        return out


if __name__ == "__main__":
    N = 256  # in_features; fused config -> grid (2, 1, 1), tiles (128, 256, 256)

    key = jax.random.PRNGKey(0)
    k_prev, k_w, k_b = jax.random.split(key, 3)

    layer = HopfieldLayer(N)
    # Deterministic non-trivial weights/state for the test.
    layer.w = jax.random.normal(k_w, (N, N), dtype=jnp.float32) * 0.1
    layer.b = jax.random.normal(k_b, (N,), dtype=jnp.float32) * 0.1
    layer.set_init_value(jax.random.normal(k_prev, (N, N), dtype=jnp.float32))

    # Pure-JAX reference for step 1 — computed BEFORE forward, since forward
    # donates (and overwrites in place) the prev buffer.
    ref1 = jnp.clip(layer.prev @ layer.w + layer.b, -1.0, 1.0)
    ref1 = jax.block_until_ready(ref1)

    out1 = layer.forward()
    out1 = jax.block_until_ready(out1)
    assert out1.shape == (N, N) and out1.dtype == jnp.float32
    assert jnp.allclose(out1, ref1, atol=1e-5, rtol=1e-5), "step-1 mismatch"

    # Second recurrence step: reference built from the kernel's step-1 output
    # (read it before the next forward donates it).
    ref2 = jnp.clip(out1 @ layer.w + layer.b, -1.0, 1.0)
    ref2 = jax.block_until_ready(ref2)

    out2 = layer.forward()
    out2 = jax.block_until_ready(out2)
    assert jnp.allclose(out2, ref2, atol=1e-5, rtol=1e-5), "step-2 mismatch"

    print("KERNEL_OK")
</pallas_src>

<mosaic_0001>
module attributes {stable_mosaic.version = 11 : i64} {
  func.func @hopfield_kernel_fused(%arg0: i32, %arg1: i32, %arg2: i32, %arg3: memref<128x256xf32, #tpu.memory_space<vmem>>, %arg4: memref<256x256xf32, #tpu.memory_space<vmem>>, %arg5: memref<1x256xf32, #tpu.memory_space<vmem>>, %arg6: memref<128x256xf32, #tpu.memory_space<vmem>>) attributes {dimension_semantics = [#tpu.dimension_semantics<parallel>, #tpu.dimension_semantics<parallel>, #tpu.dimension_semantics<arbitrary>], iteration_bounds = array<i64: 2, 1, 1>, scalar_prefetch = 0 : i64, scratch_operands = 0 : i64, tpu.core_type = #tpu.core_type<tc>, window_params = [{transform_indices = @transform_0, window_bounds = array<i64: 128, 256>}, {transform_indices = @transform_1, window_bounds = array<i64: 256, 256>}, {transform_indices = @transform_2, window_bounds = array<i64: 1, 256>}, {transform_indices = @transform_3, window_bounds = array<i64: 128, 256>}]} {
    %c0 = arith.constant 0 : index
    %c0_0 = arith.constant 0 : index
    %0 = vector.load %arg3[%c0, %c0_0] : memref<128x256xf32, #tpu.memory_space<vmem>>, vector<128x256xf32>
    %c0_1 = arith.constant 0 : index
    %c0_2 = arith.constant 0 : index
    %1 = vector.load %arg4[%c0_1, %c0_2] : memref<256x256xf32, #tpu.memory_space<vmem>>, vector<256x256xf32>
    %cst = arith.constant dense<0.000000e+00> : vector<128x256xf32>
    %2 = tpu.matmul %0, %1, %cst {dimension_numbers = #tpu.dot_dimension_numbers<[1], [0], [0], [1], [0, 0, 1, 1], [], []>} : vector<128x256xf32>, vector<256x256xf32>, vector<128x256xf32> -> vector<128x256xf32>
    %c0_3 = arith.constant 0 : index
    %c0_4 = arith.constant 0 : index
    %3 = vector.load %arg5[%c0_3, %c0_4] : memref<1x256xf32, #tpu.memory_space<vmem>>, vector<1x256xf32>
    %4 = vector.broadcast %3 : vector<1x256xf32> to vector<128x256xf32>
    %5 = arith.addf %2, %4 : vector<128x256xf32>
    %cst_5 = arith.constant -1.000000e+00 : f32
    %cst_6 = arith.constant 1.000000e+00 : f32
    %6 = vector.broadcast %cst_5 : f32 to vector<128x256xf32>
    %7 = arith.maximumf %6, %5 : vector<128x256xf32>
    %8 = vector.broadcast %cst_6 : f32 to vector<128x256xf32>
    %9 = arith.minimumf %8, %7 : vector<128x256xf32>
    %c0_7 = arith.constant 0 : index
    %c0_8 = arith.constant 0 : index
    %10 = vector.load %arg6[%c0_7, %c0_8] : memref<128x256xf32, #tpu.memory_space<vmem>>, vector<128x256xf32>
    tpu.vector_store %arg6[%c0_7, %c0_8], %9 {strides = array<i32>} : memref<128x256xf32, #tpu.memory_space<vmem>>, vector<128x256xf32>,
    return
  }
  func.func @transform_0(%arg0: i32, %arg1: i32, %arg2: i32) -> (i32, i32) {
    %c0_i32 = arith.constant 0 : i32
    return %arg0, %arg2 : i32, i32
  }
  func.func @transform_1(%arg0: i32, %arg1: i32, %arg2: i32) -> (i32, i32) {
    %c0_i32 = arith.constant 0 : i32
    return %arg2, %arg1 : i32, i32
  }
  func.func @transform_2(%arg0: i32, %arg1: i32, %arg2: i32) -> (i32, i32) {
    %c0_i32 = arith.constant 0 : i32
    %c0_i32_0 = arith.constant 0 : i32
    return %c0_i32, %arg1 : i32, i32
  }
  func.func @transform_3(%arg0: i32, %arg1: i32, %arg2: i32) -> (i32, i32) {
    %c0_i32 = arith.constant 0 : i32
    return %arg0, %arg1 : i32, i32
  }
}

</mosaic_0001>

<llo_original>
// kernel: hopfield_forward.1
$region0: #{hopfield_forward.1}
  #allocation0 [shape = 'u32[]', space=smem, size = 0x4, offset = 0x4, fixed_abs, tag = 'smem constant byte address 0x4 - core index']
  #allocation1 [shape = 'u32[144,128]{1,0:T(1,128)}', space=vmem, size = 0x12000, scoped, tag = 'internal scratch']
  %s0 = inlined_call_operand.hbm [shape: f32[256,256], index: 0, kind: input, shape index: {}, may-alias: {0,3}]
  %s1 = inlined_call_operand.hbm [shape: f32[256,256], index: 1, kind: input, shape index: {}]
  %s2 = inlined_call_operand.vmem [shape: f32[1,256], index: 2, kind: input, shape index: {}]
  %s3 = inlined_call_operand.hbm [shape: f32[256,256], index: 3, kind: output, shape index: {}, may-alias: {0,3}]
  %s4 = sld [smem:[#allocation0]]
  $region53: #{hopfield_forward.1} parent=0
    _
  %s6 = ssub.s32 1, %s4
  %s7 = scalar_select 0, %s6, %s4
  $region1: #{hopfield_forward.1} parent=0
    #allocation2 [shape = 'u8[262144]{0}', space=vmem, size = 0x40000, scoped, tag = 'input window, operand 0']
    #allocation3 [shape = 's32[2]{0}', space=sflag, size = 0x8, scoped, tag = 'scoped memory for hopfield_forward.1']
    #allocation4 [shape = 's32[2]{0}', space=sflag, size = 0x8, scoped, tag = 'scoped memory for hopfield_forward.1']
    #allocation5 [shape = 'u8[262144]{0}', space=vmem, size = 0x40000, scoped, tag = 'input window, operand 1, single buffered']
    #allocation6 [shape = 's32[1]{0}', space=sflag, size = 0x4, scoped, tag = 'scoped memory for hopfield_forward.1']
    #allocation7 [shape = 'u8[262144]{0}', space=vmem, size = 0x40000, scoped, tag = 'output window, operand 0']
    %8 = vsyncpa [#allocation3], 0
    %s9 = scalar_lea.sflag [#allocation3], 1
    %10 = vsyncpa %s9, 0
    %11 = vsyncpa [#allocation6], 0
    %12 = vsyncpa [#allocation4], 0
    %s13 = scalar_lea.sflag [#allocation4], 1
    %14 = vsyncpa %s13, 0
    loop: start=0, step=1, limit=4
    $region2: #{hopfield_forward.1} parent=1 // loop_pre_header
      _
    $region3: #{hopfield_forward.1} parent=1 // loop_header
      %s16 = sphi 0, %s20
      %p17 = scmp.ge.s32.totalorder %s16, 4
      %s23 = sphi 0, %s42
      %s24 = sphi 0, %s38
      %s25 = sphi 0, %s34
      %s26 = sphi 0, %s23
      %s27 = sphi 0, %s24
      %s28 = sphi 0, %s25
      %s29 = sphi 0, %s26
      %s30 = sphi 0, %s27
      %s31 = sphi 0, %s28
      %s47 = sphi 0, %s49
      %s50 = sphi 0, %s47
      %s51 = sphi 0, %s50
      %s67 = sphi 0, %s51
      %s75 = sphi 0, %s77
      %s78 = sphi 0, %s75
      %s79 = sphi 0, %s78
      %s95 = sphi 0, %s79
      %s101 = sphi 0, %s103
      %s104 = sphi 0, %s101
      %s105 = sphi 0, %s104
      %s121 = sphi 0, %s105
      %s129 = sphi 0, %s131
      %s132 = sphi 0, %s129
      %s133 = sphi 0, %s132
      %s149 = sphi 0, %s133
    $region4: #{hopfield_forward.1} parent=1 // loop_header_branch
      %19 = sbr.rel (%p17) target = $region8
    $region5: #{hopfield_forward.1} parent=1 // loop_body
      %s21 = ssub.s32 %s16, 1
      %s22 = ssub.s32 %s16, 2
      %s32 = sadd.s32 1, %s25
      %p33 = scmp.ge.s32.totalorder %s32, 1
      %s34 = scalar_select %p33, 0, %s32
      %s35 = sadd.s32 1, %s24
      %s36 = scalar_select %p33, %s35, %s24
      %p37 = scmp.ge.s32.totalorder %s36, 1
      %s38 = scalar_select %p37, 0, %s36
      %s39 = sadd.s32 1, %s23
      %s40 = scalar_select %p37, %s39, %s23
      %p41 = scmp.ge.s32.totalorder %s40, 2
      %s42 = scalar_select %p41, 0, %s40
      %s43 = ssub.s32 %s23, %s42
      %s44 = ssub.s32 %s25, %s34
      %s45 = sor.u32 %s43, %s44
      %p46 = scmp.eq.s32.totalorder %s45, 0
      %s48 = sadd.s32 %s47, 1
      %s49 = scalar_select %p46, %s47, %s48
      %p52 = pneg %p46
      %p53 = scmp.eq.s32.totalorder %s16, 1
      %p54 = por %p52, %p53
      %p55 = scmp.ne.s32.totalorder %s47, %s50
      %p56 = scmp.eq.s32.totalorder %s16, 0
      %p57 = por %p55, %p56
      %p58 = scmp.ne.s32.totalorder %s47, %s50
      %p59 = scmp.eq.s32.totalorder %s21, 1
      %p60 = por %p58, %p59
      %p61 = scmp.ne.s32.totalorder %s50, %s51
      %p62 = scmp.eq.s32.totalorder %s21, 0
      %p63 = por %p61, %p62
      %p64 = scmp.ne.s32.totalorder %s50, %s51
      %p65 = scmp.eq.s32.totalorder %s22, 1
      %p66 = por %p64, %p65
      %p68 = scmp.ne.s32.totalorder %s51, %s67
      %p69 = scmp.eq.s32.totalorder %s22, 0
      %p70 = por %p68, %p69
      %s71 = ssub.s32 %s25, %s34
      %s72 = ssub.s32 %s24, %s38
      %s73 = sor.u32 %s71, %s72
      %p74 = scmp.eq.s32.totalorder %s73, 0
      %s76 = sadd.s32 %s75, 1
      %s77 = scalar_select %p74, %s75, %s76
      %p80 = pneg %p74
      %p81 = scmp.eq.s32.totalorder %s16, 1
      %p82 = por %p80, %p81
      %p83 = scmp.ne.s32.totalorder %s75, %s78
      %p84 = scmp.eq.s32.totalorder %s16, 0
      %p85 = por %p83, %p84
      %p86 = scmp.ne.s32.totalorder %s75, %s78
      %p87 = scmp.eq.s32.totalorder %s21, 1
      %p88 = por %p86, %p87
      %p89 = scmp.ne.s32.totalorder %s78, %s79
      %p90 = scmp.eq.s32.totalorder %s21, 0
      %p91 = por %p89, %p90
      %p92 = scmp.ne.s32.totalorder %s78, %s79
      %p93 = scmp.eq.s32.totalorder %s22, 1
      %p94 = por %p92, %p93
      %p96 = scmp.ne.s32.totalorder %s79, %s95
      %p97 = scmp.eq.s32.totalorder %s22, 0
      %p98 = por %p96, %p97
      %s99 = ssub.s32 %s24, %s38
      %p100 = scmp.eq.s32.totalorder %s99, 0
      %s102 = sadd.s32 %s101, 1
      %s103 = scalar_select %p100, %s101, %s102
      %p106 = pneg %p100
      %p107 = scmp.eq.s32.totalorder %s16, 1
      %p108 = por %p106, %p107
      %p109 = scmp.ne.s32.totalorder %s101, %s104
      %p110 = scmp.eq.s32.totalorder %s16, 0
      %p111 = por %p109, %p110
      %p112 = scmp.ne.s32.totalorder %s101, %s104
      %p113 = scmp.eq.s32.totalorder %s21, 1
      %p114 = por %p112, %p113
      %p115 = scmp.ne.s32.totalorder %s104, %s105
      %p116 = scmp.eq.s32.totalorder %s21, 0
      %p117 = por %p115, %p116
      %p118 = scmp.ne.s32.totalorder %s104, %s105
      %p119 = scmp.eq.s32.totalorder %s22, 1
      %p120 = por %p118, %p119
      %p122 = scmp.ne.s32.totalorder %s105, %s121
      %p123 = scmp.eq.s32.totalorder %s22, 0
      %p124 = por %p122, %p123
      %s125 = ssub.s32 %s23, %s42
      %s126 = ssub.s32 %s24, %s38
      %s127 = sor.u32 %s125, %s126
      %p128 = scmp.eq.s32.totalorder %s127, 0
      %s130 = sadd.s32 %s129, 1
      %s131 = scalar_select %p128, %s129, %s130
      %p134 = pneg %p128
      %p135 = scmp.eq.s32.totalorder %s16, 1
      %p136 = por %p134, %p135
      %p137 = scmp.ne.s32.totalorder %s129, %s132
      %p138 = scmp.eq.s32.totalorder %s16, 0
      %p139 = por %p137, %p138
      %p140 = scmp.ne.s32.totalorder %s129, %s132
      %p141 = scmp.eq.s32.totalorder %s21, 1
      %p142 = por %p140, %p141
      %p143 = scmp.ne.s32.totalorder %s132, %s133
      %p144 = scmp.eq.s32.totalorder %s21, 0
      %p145 = por %p143, %p144
      %p146 = scmp.ne.s32.totalorder %s132, %s133
      %p147 = scmp.eq.s32.totalorder %s22, 1
      %p148 = por %p146, %p147
      %p150 = scmp.ne.s32.totalorder %s133, %s149
      %p151 = scmp.eq.s32.totalorder %s22, 0
      %p152 = por %p150, %p151
      %p153 = scmp.le.s32.totalorder 1, %s16
      %p154 = scmp.lt.s32.totalorder %s16, 3
      %p155 = pnand %p153, %p154
      %p156 = pneg %p155
      // Predicated region
      $region9: #{hopfield_forward.1} parent=5 // pred_check
        _
      $region10: #{hopfield_forward.1} parent=5 // pred_check_branch
        %158 = sbr.rel (%p155) target = $region12
      $region11: #{hopfield_forward.1} parent=5 // pred_region
        %s159 = ssub.s32 %s16, 1
        // Predicated region
        $region13: #{hopfield_forward.1} parent=11 // pred_check
          %p160 = pneg %p91
        $region14: #{hopfield_forward.1} parent=11 // pred_check_branch
          %162 = sbr.rel (%p160) target = $region16
        $region15: #{hopfield_forward.1} parent=11 // pred_region
          %s163 = smul.u32 32, %s28
          %s164 = smul.u32 2, %s27
          %s166 = ssub.s32 8192, 8192
          %167 = vsyncadd [#allocation6], %s166
          %s168 = smul.addr %s163, 2
          %s169 = sadd.s32 %s164, %s168
          %s170 = smul.addr %s169, 128
          %s171 = scalar_lea.hbm %s1, %s170
          %s172 = sshll.u32 [#allocation5], 4
          %s173 = int_to_ptr.vmem [resolvable:$true] %s172
          %178 = dma.hbm_to_vmem [thread:$0]  %s171, 8192, %s173, [#allocation6], 256, 256, 16
        $region16: #{hopfield_forward.1} parent=11 // pred_fallthru
          _
        // Predicated region
        $region17: #{hopfield_forward.1} parent=11 // pred_check
          %p179 = pneg %p117
        $region18: #{hopfield_forward.1} parent=11 // pred_check_branch
          %181 = sbr.rel (%p179) target = $region20
        $region19: #{hopfield_forward.1} parent=11 // pred_region
          %s182 = smul.u32 2, %s27
          %p183 = scmp.lt.s32.totalorder %s182, 1
          %s184 = scalar_select %p183, %s182, 1
          %s185 = scalar_lea.vmem %s2, %s184
          %s186 = smul.u32 2, %s27
        $region20: #{hopfield_forward.1} parent=11 // pred_fallthru
          _
      $region12: #{hopfield_forward.1} parent=5 // pred_fallthru
        _
      %p187 = scmp.lt.s32.totalorder %s16, 2
      // Predicated region
      $region21: #{hopfield_forward.1} parent=5 // pred_check
        %p188 = pneg %p187
      $region22: #{hopfield_forward.1} parent=5 // pred_check_branch
        %190 = sbr.rel (%p188) target = $region24
      $region23: #{hopfield_forward.1} parent=5 // pred_region
        // Predicated region
        $region25: #{hopfield_forward.1} parent=23 // pred_check
          %p191 = pneg %p57
        $region26: #{hopfield_forward.1} parent=23 // pred_check_branch
          %193 = sbr.rel (%p191) target = $region28
        $region27: #{hopfield_forward.1} parent=23 // pred_region
          %s194 = sand.u32 %s47, 1
          %s195 = scalar_lea.sflag [#allocation3], %s194
          %s196 = sand.u32 %s47, 1
          %s197 = smul.addr %s196, 256
          %s198 = scalar_lea.vmem [#allocation2], %s197
          %s199 = smul.u32 16, %s23
          %s200 = smul.u32 2, %s25
          %s202 = ssub.s32 4096, 4096
          %203 = vsyncadd %s195, %s202
          %s204 = smul.addr %s199, 2
          %s205 = sadd.s32 %s200, %s204
          %s206 = smul.addr %s205, 128
          %s207 = scalar_lea.hbm %s0, %s206
          %s208 = sshll.u32 %s198, 4
          %s209 = int_to_ptr.vmem [resolvable:$true] %s208
          %214 = dma.hbm_to_vmem [thread:$0]  %s207, 4096, %s209, %s195, 256, 256, 16
        $region28: #{hopfield_forward.1} parent=23 // pred_fallthru
          _
      $region24: #{hopfield_forward.1} parent=5 // pred_fallthru
        _
      %p215 = scmp.le.s32.totalorder 1, %s16
      %p216 = scmp.lt.s32.totalorder %s16, 3
      %p217 = pnand %p215, %p216
      %p218 = pneg %p217
      // Predicated region
      $region29: #{hopfield_forward.1} parent=5 // pred_check
        _
      $region30: #{hopfield_forward.1} parent=5 // pred_check_branch
        %220 = sbr.rel (%p217) target = $region32
      $region31: #{hopfield_forward.1} parent=5 // pred_region
        %s221 = ssub.s32 %s16, 1
        %s222 = sand.u32 %s50, 1
        %s223 = scalar_lea.sflag [#allocation3], %s222
        %s224 = sand.u32 %s50, 1
        %s225 = smul.addr %s224, 256
        %s226 = scalar_lea.vmem [#allocation2], %s225
        // Predicated region
        $region33: #{hopfield_forward.1} parent=31 // pred_check
          %p227 = pneg %p63
        $region34: #{hopfield_forward.1} parent=31 // pred_check_branch
          %229 = sbr.rel (%p227) target = $region36
        $region35: #{hopfield_forward.1} parent=31 // pred_region
          %230 = dma.done %s223, 4096
        $region36: #{hopfield_forward.1} parent=31 // pred_fallthru
          _
        // Predicated region
        $region37: #{hopfield_forward.1} parent=31 // pred_check
          %p231 = pneg %p91
        $region38: #{hopfield_forward.1} parent=31 // pred_check_branch
          %233 = sbr.rel (%p231) target = $region40
        $region39: #{hopfield_forward.1} parent=31 // pred_region
          %234 = dma.done [#allocation6], 8192
        $region40: #{hopfield_forward.1} parent=31 // pred_fallthru
          _
        %s235 = sand.u32 %s50, 1
        %s236 = scalar_lea.sflag [#allocation3], %s235
        %s237 = sand.u32 %s50, 1
        %s238 = smul.addr %s237, 256
        %s239 = scalar_lea.vmem [#allocation2], %s238
        %p240 = pneg %p63
        %p241 = pneg %p60
        %p242 = pneg %p91
        %p243 = pneg %p88
        %s244 = smul.u32 2, %s27
        %p245 = scmp.lt.s32.totalorder %s244, 1
        %s246 = scalar_select %p245, %s244, 1
        %s247 = scalar_lea.vmem %s2, %s246
        %p248 = pneg %p117
        %p249 = pneg %p114
        %p250 = pneg %p145
        %p251 = pneg %p142
        %s252 = sand.u32 %s132, 1
        %s253 = scalar_lea.sflag [#allocation4], %s252
        %s254 = sand.u32 %s132, 1
        %s255 = smul.addr %s254, 256
        %s256 = scalar_lea.vmem [#allocation7], %s255
        %s257 = smul.u32 16, %s26
        %s258 = smul.u32 2, %s28
        %s259 = smul.u32 32, %s28
        %s260 = smul.u32 2, %s27
        %s261 = smul.u32 2, %s27
        %p262 = scmp.lt.s32.totalorder %s261, 1
        %s263 = scalar_select %p262, %s261, 1
        %s264 = scalar_lea.vmem %s2, %s263
        %s265 = smul.u32 2, %s27
        %s266 = smul.u32 16, %s26
        %s267 = smul.u32 2, %s27
        %v268 = vld [vmem:[%s226] sm:$0xff]
        %v269 = vld [vmem:[%s226 + $0x8] sm:$0xff]
        %v270 = vld [vmem:[%s226 + $0x10] sm:$0xff]
        %v271 = vld [vmem:[%s226 + $0x18] sm:$0xff]
        %v272 = vld [vmem:[%s226 + $0x20] sm:$0xff]
        %v273 = vld [vmem:[%s226 + $0x28] sm:$0xff]
        %v274 = vld [vmem:[%s226 + $0x30] sm:$0xff]
        %v275 = vld [vmem:[%s226 + $0x38] sm:$0xff]
        %v276 = vld [vmem:[%s226 + $0x40] sm:$0xff]
        %v277 = vld [vmem:[%s226 + $0x48] sm:$0xff]
        %v278 = vld [vmem:[%s226 + $0x50] sm:$0xff]
        %v279 = vld [vmem:[%s226 + $0x58] sm:$0xff]
        %v280 = vld [vmem:[%s226 + $0x60] sm:$0xff]
        %v281 = vld [vmem:[%s226 + $0x68] sm:$0xff]
        %v282 = vld [vmem:[%s226 + $0x70] sm:$0xff]
        %v283 = vld [vmem:[%s226 + $0x78] sm:$0xff]
        %v284 = vld [vmem:[%s226 + $0x80] sm:$0xff]
        %v285 = vld [vmem:[%s226 + $0x88] sm:$0xff]
        %v286 = vld [vmem:[%s226 + $0x90] sm:$0xff]
        %v287 = vld [vmem:[%s226 + $0x98] sm:$0xff]
        %v288 = vld [vmem:[%s226 + $0xa0] sm:$0xff]
        %v289 = vld [vmem:[%s226 + $0xa8] sm:$0xff]
        %v290 = vld [vmem:[%s226 + $0xb0] sm:$0xff]
        %v291 = vld [vmem:[%s226 + $0xb8] sm:$0xff]
        %v292 = vld [vmem:[%s226 + $0xc0] sm:$0xff]
        %v293 = vld [vmem:[%s226 + $0xc8] sm:$0xff]
        %v294 = vld [vmem:[%s226 + $0xd0] sm:$0xff]
        %v295 = vld [vmem:[%s226 + $0xd8] sm:$0xff]
        %v296 = vld [vmem:[%s226 + $0xe0] sm:$0xff]
        %v297 = vld [vmem:[%s226 + $0xe8] sm:$0xff]
        %v298 = vld [vmem:[%s226 + $0xf0] sm:$0xff]
        %v299 = vld [vmem:[%s226 + $0xf8] sm:$0xff]
        %v300 = vld [vmem:[#allocation5] sm:$0xff]
        %v301 = vld [vmem:[#allocation5 + $0x8] sm:$0xff]
        %v302 = vld [vmem:[#allocation5 + $0x10] sm:$0xff]
        %v303 = vld [vmem:[#allocation5 + $0x18] sm:$0xff]
        %v304 = vld [vmem:[#allocation5 + $0x20] sm:$0xff]
        %v305 = vld [vmem:[#allocation5 + $0x28] sm:$0xff]
        %v306 = vld [vmem:[#allocation5 + $0x30] sm:$0xff]
        %v307 = vld [vmem:[#allocation5 + $0x38] sm:$0xff]
        %v308 = vld [vmem:[#allocation5 + $0x40] sm:$0xff]
        %v309 = vld [vmem:[#allocation5 + $0x48] sm:$0xff]
        %v310 = vld [vmem:[#allocation5 + $0x50] sm:$0xff]
        %v311 = vld [vmem:[#allocation5 + $0x58] sm:$0xff]
        %v312 = vld [vmem:[#allocation5 + $0x60] sm:$0xff]
        %v313 = vld [vmem:[#allocation5 + $0x68] sm:$0xff]
        %v314 = vld [vmem:[#allocation5 + $0x70] sm:$0xff]
        %v315 = vld [vmem:[#allocation5 + $0x78] sm:$0xff]
        %v316 = vld [vmem:[#allocation5 + $0x80] sm:$0xff]
        %v317 = vld [vmem:[#allocation5 + $0x88] sm:$0xff]
        %v318 = vld [vmem:[#allocation5 + $0x90] sm:$0xff]
        %v319 = vld [vmem:[#allocation5 + $0x98] sm:$0xff]
        %v320 = vld [vmem:[#allocation5 + $0xa0] sm:$0xff]
        %v321 = vld [vmem:[#allocation5 + $0xa8] sm:$0xff]
        %v322 = vld [vmem:[#allocation5 + $0xb0] sm:$0xff]
        %v323 = vld [vmem:[#allocation5 + $0xb8] sm:$0xff]
        %v324 = vld [vmem:[#allocation5 + $0xc0] sm:$0xff]
        %v325 = vld [vmem:[#allocation5 + $0xc8] sm:$0xff]
        %v326 = vld [vmem:[#allocation5 + $0xd0] sm:$0xff]
        %v327 = vld [vmem:[#allocation5 + $0xd8] sm:$0xff]
        %v328 = vld [vmem:[#allocation5 + $0xe0] sm:$0xff]
        %v329 = vld [vmem:[#allocation5 + $0xe8] sm:$0xff]
        %v330 = vld [vmem:[#allocation5 + $0xf0] sm:$0xff]
        %v331 = vld [vmem:[#allocation5 + $0xf8] sm:$0xff]
        %v332 = vld [vmem:[#allocation5 + $0x100] sm:$0xff]
        %v333 = vld [vmem:[#allocation5 + $0x108] sm:$0xff]
        %v334 = vld [vmem:[#allocation5 + $0x110] sm:$0xff]
        %v335 = vld [vmem:[#allocation5 + $0x118] sm:$0xff]
        %v336 = vld [vmem:[#allocation5 + $0x120] sm:$0xff]
        %v337 = vld [vmem:[#allocation5 + $0x128] sm:$0xff]
        %v338 = vld [vmem:[#allocation5 + $0x130] sm:$0xff]
        %v339 = vld [vmem:[#allocation5 + $0x138] sm:$0xff]
        %v340 = vld [vmem:[#allocation5 + $0x140] sm:$0xff]
        %v341 = vld [vmem:[#allocation5 + $0x148] sm:$0xff]
        %v342 = vld [vmem:[#allocation5 + $0x150] sm:$0xff]
        %v343 = vld [vmem:[#allocation5 + $0x158] sm:$0xff]
        %v344 = vld [vmem:[#allocation5 + $0x160] sm:$0xff]
        %v345 = vld [vmem:[#allocation5 + $0x168] sm:$0xff]
        %v346 = vld [vmem:[#allocation5 + $0x170] sm:$0xff]
        %v347 = vld [vmem:[#allocation5 + $0x178] sm:$0xff]
        %v348 = vld [vmem:[#allocation5 + $0x180] sm:$0xff]
        %v349 = vld [vmem:[#allocation5 + $0x188] sm:$0xff]
        %v350 = vld [vmem:[#allocation5 + $0x190] sm:$0xff]
        %v351 = vld [vmem:[#allocation5 + $0x198] sm:$0xff]
        %v352 = vld [vmem:[#allocation5 + $0x1a0] sm:$0xff]
        %v353 = vld [vmem:[#allocation5 + $0x1a8] sm:$0xff]
        %v354 = vld [vmem:[#allocation5 + $0x1b0] sm:$0xff]
        %v355 = vld [vmem:[#allocation5 + $0x1b8] sm:$0xff]
        %v356 = vld [vmem:[#allocation5 + $0x1c0] sm:$0xff]
        %v357 = vld [vmem:[#allocation5 + $0x1c8] sm:$0xff]
        %v358 = vld [vmem:[#allocation5 + $0x1d0] sm:$0xff]
        %v359 = vld [vmem:[#allocation5 + $0x1d8] sm:$0xff]
        %v360 = vld [vmem:[#allocation5 + $0x1e0] sm:$0xff]
        %v361 = vld [vmem:[#allocation5 + $0x1e8] sm:$0xff]
        %v362 = vld [vmem:[#allocation5 + $0x1f0] sm:$0xff]
        %v363 = vld [vmem:[#allocation5 + $0x1f8] sm:$0xff]
        %v364 = vld [vmem:[%s264] sm:$0x3]
        %v366 = vlaneseq
        %v367 = vshrl.u32 %v366, 7
        %v368 = vsub.s32 0, %v367
        %v369 = vrot.slane %v364, %v368
        %v370 = vlaneseq
        %v371 = vshrl.u32 %v370, 7
        %v372 = vsub.s32 1, %v371
        %v373 = vrot.slane %v364, %v372
        %376 = vmatprep.subr.mxu0 %v331
        %377 = vmatpush1.msra.mxu0 %v330
        %378 = vmatprep.subr.mxu0 %v329
        %379 = vmatpush1.msra.mxu0 %v328
        %380 = vmatprep.subr.mxu0 %v327
        %381 = vmatpush1.msra.mxu0 %v326
        %382 = vmatprep.subr.mxu0 %v325
        %383 = vmatpush1.msra.mxu0 %v324
        %384 = vmatprep.subr.mxu0 %v323
        %385 = vmatpush1.msra.mxu0 %v322
        %386 = vmatprep.subr.mxu0 %v321
        %387 = vmatpush1.msra.mxu0 %v320
        %388 = vmatprep.subr.mxu0 %v319
        %389 = vmatpush1.msra.mxu0 %v318
        %390 = vmatprep.subr.mxu0 %v317
        %391 = vmatpush1.msra.mxu0 %v316
        %392 = vmatprep.subr.mxu0 %v315
        %393 = vmatpush1.msra.mxu0 %v314
        %394 = vmatprep.subr.mxu0 %v313
        %395 = vmatpush1.msra.mxu0 %v312
        %396 = vmatprep.subr.mxu0 %v311
        %397 = vmatpush1.msra.mxu0 %v310
        %398 = vmatprep.subr.mxu0 %v309
        %399 = vmatpush1.msra.mxu0 %v308
        %400 = vmatprep.subr.mxu0 %v307
        %401 = vmatpush1.msra.mxu0 %v306
        %402 = vmatprep.subr.mxu0 %v305
        %403 = vmatpush1.msra.mxu0 %v304
        %404 = vmatprep.subr.mxu0 %v303
        %405 = vmatpush1.msra.mxu0 %v302
        %406 = vmatprep.subr.mxu0 %v301
        %407 = vmatpush1.msra.mxu0 %v300
        %408 = vmatprep.subr.mxu0 %v363
        %409 = vmatpush2.msra.mxu0 %v362
        %410 = vmatprep.subr.mxu0 %v361
        %411 = vmatpush2.msra.mxu0 %v360
        %412 = vmatprep.subr.mxu0 %v359
        %413 = vmatpush2.msra.mxu0 %v358
        %414 = vmatprep.subr.mxu0 %v357
        %415 = vmatpush2.msra.mxu0 %v356
        %416 = vmatprep.subr.mxu0 %v355
        %417 = vmatpush2.msra.mxu0 %v354
        %418 = vmatprep.subr.mxu0 %v353
        %419 = vmatpush2.msra.mxu0 %v352
        %420 = vmatprep.subr.mxu0 %v351
        %421 = vmatpush2.msra.mxu0 %v350
        %422 = vmatprep.subr.mxu0 %v349
        %423 = vmatpush2.msra.mxu0 %v348
        %424 = vmatprep.subr.mxu0 %v347
        %425 = vmatpush2.msra.mxu0 %v346
        %426 = vmatprep.subr.mxu0 %v345
        %427 = vmatpush2.msra.mxu0 %v344
        %428 = vmatprep.subr.mxu0 %v343
        %429 = vmatpush2.msra.mxu0 %v342
        %430 = vmatprep.subr.mxu0 %v341
        %431 = vmatpush2.msra.mxu0 %v340
        %432 = vmatprep.subr.mxu0 %v339
        %433 = vmatpush2.msra.mxu0 %v338
        %434 = vmatprep.subr.mxu0 %v337
        %435 = vmatpush2.msra.mxu0 %v336
        %436 = vmatprep.subr.mxu0 %v335
        %437 = vmatpush2.msra.mxu0 %v334
        %438 = vmatprep.subr.mxu0 %v333
        %439 = vmatpush2.msra.mxu0 %v332
        %440 = vmatprep.mubr.f32.mxu0 %v269
        %441 = vmatmul.mubr.f32.gmra.mxu0 %v268
        %v442 = vpop.f32.mrf.mxu0
        %v443 = vadd.f32 %v369, %v442
        %v444 = vpop.f32.mrf.mxu0
        %v445 = vadd.f32 %v373, %v444
        %446 = vmatprep.mubr.f32.mxu0 %v271
        %447 = vmatmul.mubr.f32.gmra.mxu0 %v270
        %v448 = vpop.f32.mrf.mxu0
        %v449 = vadd.f32 %v369, %v448
        %v450 = vpop.f32.mrf.mxu0
        %v451 = vadd.f32 %v373, %v450
        %452 = vmatprep.mubr.f32.mxu0 %v273
        %453 = vmatmul.mubr.f32.gmra.mxu0 %v272
        %v454 = vpop.f32.mrf.mxu0
        %v455 = vadd.f32 %v369, %v454
        %v456 = vpop.f32.mrf.mxu0
        %v457 = vadd.f32 %v373, %v456
        %458 = vmatprep.mubr.f32.mxu0 %v275
        %459 = vmatmul.mubr.f32.gmra.mxu0 %v274
        %v460 = vpop.f32.mrf.mxu0
        %v461 = vadd.f32 %v369, %v460
        %v462 = vpop.f32.mrf.mxu0
        %v463 = vadd.f32 %v373, %v462
        %464 = vmatprep.mubr.f32.mxu0 %v277
        %465 = vmatmul.mubr.f32.gmra.mxu0 %v276
        %v466 = vpop.f32.mrf.mxu0
        %v467 = vadd.f32 %v369, %v466
        %v468 = vpop.f32.mrf.mxu0
        %v469 = vadd.f32 %v373, %v468
        %470 = vmatprep.mubr.f32.mxu0 %v279
        %471 = vmatmul.mubr.f32.gmra.mxu0 %v278
        %v472 = vpop.f32.mrf.mxu0
        %v473 = vadd.f32 %v369, %v472
        %v474 = vpop.f32.mrf.mxu0
        %v475 = vadd.f32 %v373, %v474
        %476 = vmatprep.mubr.f32.mxu0 %v281
        %477 = vmatmul.mubr.f32.gmra.mxu0 %v280
        %v478 = vpop.f32.mrf.mxu0
        %v479 = vadd.f32 %v369, %v478
        %v480 = vpop.f32.mrf.mxu0
        %v481 = vadd.f32 %v373, %v480
        %482 = vmatprep.mubr.f32.mxu0 %v283
        %483 = vmatmul.mubr.f32.gmra.mxu0 %v282
        %v484 = vpop.f32.mrf.mxu0
        %v485 = vadd.f32 %v369, %v484
        %v486 = vpop.f32.mrf.mxu0
        %v487 = vadd.f32 %v373, %v486
        %488 = vmatprep.mubr.f32.mxu0 %v285
        %489 = vmatmul.mubr.f32.gmra.mxu0 %v284
        %v490 = vpop.f32.mrf.mxu0
        %v491 = vadd.f32 %v369, %v490
        %v492 = vpop.f32.mrf.mxu0
        %v493 = vadd.f32 %v373, %v492
        %494 = vmatprep.mubr.f32.mxu0 %v287
        %495 = vmatmul.mubr.f32.gmra.mxu0 %v286
        %v496 = vpop.f32.mrf.mxu0
        %v497 = vadd.f32 %v369, %v496
        %v498 = vpop.f32.mrf.mxu0
        %v499 = vadd.f32 %v373, %v498
        %500 = vmatprep.mubr.f32.mxu0 %v289
        %501 = vmatmul.mubr.f32.gmra.mxu0 %v288
        %v502 = vpop.f32.mrf.mxu0
        %v503 = vadd.f32 %v369, %v502
        %v504 = vpop.f32.mrf.mxu0
        %v505 = vadd.f32 %v373, %v504
        %506 = vmatprep.mubr.f32.mxu0 %v291
        %507 = vmatmul.mubr.f32.gmra.mxu0 %v290
        %v508 = vpop.f32.mrf.mxu0
        %v509 = vadd.f32 %v369, %v508
        %v510 = vpop.f32.mrf.mxu0
        %v511 = vadd.f32 %v373, %v510
        %512 = vmatprep.mubr.f32.mxu0 %v293
        %513 = vmatmul.mubr.f32.gmra.mxu0 %v292
        %v514 = vpop.f32.mrf.mxu0
        %v515 = vadd.f32 %v369, %v514
        %v516 = vpop.f32.mrf.mxu0
        %v517 = vadd.f32 %v373, %v516
        %518 = vmatprep.mubr.f32.mxu0 %v295
        %519 = vmatmul.mubr.f32.gmra.mxu0 %v294
        %v520 = vpop.f32.mrf.mxu0
        %v521 = vadd.f32 %v369, %v520
        %v522 = vpop.f32.mrf.mxu0
        %v523 = vadd.f32 %v373, %v522
        %524 = vmatprep.mubr.f32.mxu0 %v297
        %525 = vmatmul.mubr.f32.gmra.mxu0 %v296
        %v526 = vpop.f32.mrf.mxu0
        %v527 = vadd.f32 %v369, %v526
        %v528 = vpop.f32.mrf.mxu0
        %v529 = vadd.f32 %v373, %v528
        %530 = vmatprep.mubr.f32.mxu0 %v299
        %531 = vmatmul.mubr.f32.gmra.mxu0 %v298
        %v532 = vpop.f32.mrf.mxu0
        %v533 = vadd.f32 %v369, %v532
        %v534 = vpop.f32.mrf.mxu0
        %v535 = vadd.f32 %v373, %v534
        %536 = vdwg.mxu0
        %v537 = vmax.f32 %v443, -1.0
        %v538 = vmax.f32 %v445, -1.0
        %v539 = vmax.f32 %v449, -1.0
        %v540 = vmax.f32 %v451, -1.0
        %v541 = vmax.f32 %v455, -1.0
        %v542 = vmax.f32 %v457, -1.0
        %v543 = vmax.f32 %v461, -1.0
        %v544 = vmax.f32 %v463, -1.0
        %v545 = vmax.f32 %v467, -1.0
        %v546 = vmax.f32 %v469, -1.0
        %v547 = vmax.f32 %v473, -1.0
        %v548 = vmax.f32 %v475, -1.0
        %v549 = vmax.f32 %v479, -1.0
        %v550 = vmax.f32 %v481, -1.0
        %v551 = vmax.f32 %v485, -1.0
        %v552 = vmax.f32 %v487, -1.0
        %v553 = vmax.f32 %v491, -1.0
        %v554 = vmax.f32 %v493, -1.0
        %v555 = vmax.f32 %v497, -1.0
        %v556 = vmax.f32 %v499, -1.0
        %v557 = vmax.f32 %v503, -1.0
        %v558 = vmax.f32 %v505, -1.0
        %v559 = vmax.f32 %v509, -1.0
        %v560 = vmax.f32 %v511, -1.0
        %v561 = vmax.f32 %v515, -1.0
        %v562 = vmax.f32 %v517, -1.0
        %v563 = vmax.f32 %v521, -1.0
        %v564 = vmax.f32 %v523, -1.0
        %v565 = vmax.f32 %v527, -1.0
        %v566 = vmax.f32 %v529, -1.0
        %v567 = vmax.f32 %v533, -1.0
        %v568 = vmax.f32 %v535, -1.0
        %v569 = vmin.f32 %v537, 1.0
        %v570 = vmin.f32 %v538, 1.0
        %v571 = vmin.f32 %v539, 1.0
        %v572 = vmin.f32 %v540, 1.0
        %v573 = vmin.f32 %v541, 1.0
        %v574 = vmin.f32 %v542, 1.0
        %v575 = vmin.f32 %v543, 1.0
        %v576 = vmin.f32 %v544, 1.0
        %v577 = vmin.f32 %v545, 1.0
        %v578 = vmin.f32 %v546, 1.0
        %v579 = vmin.f32 %v547, 1.0
        %v580 = vmin.f32 %v548, 1.0
        %v581 = vmin.f32 %v549, 1.0
        %v582 = vmin.f32 %v550, 1.0
        %v583 = vmin.f32 %v551, 1.0
        %v584 = vmin.f32 %v552, 1.0
        %v585 = vmin.f32 %v553, 1.0
        %v586 = vmin.f32 %v554, 1.0
        %v587 = vmin.f32 %v555, 1.0
        %v588 = vmin.f32 %v556, 1.0
        %v589 = vmin.f32 %v557, 1.0
        %v590 = vmin.f32 %v558, 1.0
        %v591 = vmin.f32 %v559, 1.0
        %v592 = vmin.f32 %v560, 1.0
        %v593 = vmin.f32 %v561, 1.0
        %v594 = vmin.f32 %v562, 1.0
        %v595 = vmin.f32 %v563, 1.0
        %v596 = vmin.f32 %v564, 1.0
        %v597 = vmin.f32 %v565, 1.0
        %v598 = vmin.f32 %v566, 1.0
        %v599 = vmin.f32 %v567, 1.0
        %v600 = vmin.f32 %v568, 1.0
        %601 = vst [vmem:[%s256] sm:$0xff] %v569
        %602 = vst [vmem:[%s256 + $0x8] sm:$0xff] %v570
        %603 = vst [vmem:[%s256 + $0x10] sm:$0xff] %v571
        %604 = vst [vmem:[%s256 + $0x18] sm:$0xff] %v572
        %605 = vst [vmem:[%s256 + $0x20] sm:$0xff] %v573
        %606 = vst [vmem:[%s256 + $0x28] sm:$0xff] %v574
        %607 = vst [vmem:[%s256 + $0x30] sm:$0xff] %v575
        %608 = vst [vmem:[%s256 + $0x38] sm:$0xff] %v576
        %609 = vst [vmem:[%s256 + $0x40] sm:$0xff] %v577
        %610 = vst [vmem:[%s256 + $0x48] sm:$0xff] %v578
        %611 = vst [vmem:[%s256 + $0x50] sm:$0xff] %v579
        %612 = vst [vmem:[%s256 + $0x58] sm:$0xff] %v580
        %613 = vst [vmem:[%s256 + $0x60] sm:$0xff] %v581
        %614 = vst [vmem:[%s256 + $0x68] sm:$0xff] %v582
        %615 = vst [vmem:[%s256 + $0x70] sm:$0xff] %v583
        %616 = vst [vmem:[%s256 + $0x78] sm:$0xff] %v584
        %617 = vst [vmem:[%s256 + $0x80] sm:$0xff] %v585
        %618 = vst [vmem:[%s256 + $0x88] sm:$0xff] %v586
        %619 = vst [vmem:[%s256 + $0x90] sm:$0xff] %v587
        %620 = vst [vmem:[%s256 + $0x98] sm:$0xff] %v588
        %621 = vst [vmem:[%s256 + $0xa0] sm:$0xff] %v589
        %622 = vst [vmem:[%s256 + $0xa8] sm:$0xff] %v590
        %623 = vst [vmem:[%s256 + $0xb0] sm:$0xff] %v591
        %624 = vst [vmem:[%s256 + $0xb8] sm:$0xff] %v592
        %625 = vst [vmem:[%s256 + $0xc0] sm:$0xff] %v593
        %626 = vst [vmem:[%s256 + $0xc8] sm:$0xff] %v594
        %627 = vst [vmem:[%s256 + $0xd0] sm:$0xff] %v595
        %628 = vst [vmem:[%s256 + $0xd8] sm:$0xff] %v596
        %629 = vst [vmem:[%s256 + $0xe0] sm:$0xff] %v597
        %630 = vst [vmem:[%s256 + $0xe8] sm:$0xff] %v598
        %631 = vst [vmem:[%s256 + $0xf0] sm:$0xff] %v599
        %632 = vst [vmem:[%s256 + $0xf8] sm:$0xff] %v600
        %s633 = sand.u32 %s132, 1
        %s634 = scalar_lea.sflag [#allocation4], %s633
        %s635 = sand.u32 %s132, 1
        %s636 = smul.addr %s635, 256
        %s637 = scalar_lea.vmem [#allocation7], %s636
        // Predicated region
        $region41: #{hopfield_forward.1} parent=31 // pred_check
          %p638 = pneg %p142
        $region42: #{hopfield_forward.1} parent=31 // pred_check_branch
          %640 = sbr.rel (%p638) target = $region44
        $region43: #{hopfield_forward.1} parent=31 // pred_region
          %s641 = smul.u32 16, %s26
          %s642 = smul.u32 2, %s27
          %s644 = ssub.s32 4096, 4096
          %645 = vsyncadd %s634, %s644
          %s646 = smul.addr %s641, 2
          %s647 = sadd.s32 %s642, %s646
          %s648 = smul.addr %s647, 128
          %s649 = scalar_lea.hbm %s3, %s648
          %s650 = sshll.u32 %s637, 4
          %s651 = int_to_ptr.vmem [resolvable:$true] %s650
          %656 = dma.vmem_to_hbm [thread:$0]  %s651, 4096, %s649, %s634, 256, 256, 16
        $region44: #{hopfield_forward.1} parent=31 // pred_fallthru
          _
      $region32: #{hopfield_forward.1} parent=5 // pred_fallthru
        _
      %p657 = scmp.le.s32.totalorder 2, %s16
      // Predicated region
      $region45: #{hopfield_forward.1} parent=5 // pred_check
        %p658 = pneg %p657
      $region46: #{hopfield_forward.1} parent=5 // pred_check_branch
        %660 = sbr.rel (%p658) target = $region48
      $region47: #{hopfield_forward.1} parent=5 // pred_region
        %s661 = ssub.s32 %s16, 2
        // Predicated region
        $region49: #{hopfield_forward.1} parent=47 // pred_check
          %p662 = pneg %p148
        $region50: #{hopfield_forward.1} parent=47 // pred_check_branch
          %664 = sbr.rel (%p662) target = $region52
        $region51: #{hopfield_forward.1} parent=47 // pred_region
          %s665 = sand.u32 %s133, 1
          %s666 = scalar_lea.sflag [#allocation4], %s665
          %s667 = sand.u32 %s133, 1
          %s668 = smul.addr %s667, 256
          %s669 = scalar_lea.vmem [#allocation7], %s668
          %670 = dma.done %s666, 4096
        $region52: #{hopfield_forward.1} parent=47 // pred_fallthru
          _
      $region48: #{hopfield_forward.1} parent=5 // pred_fallthru
        _
    $region6: #{hopfield_forward.1} parent=1 // loop_footer
      %s20 = sadd.s32 1, %s16
    $region7: #{hopfield_forward.1} parent=1 // loop_footer_branch
      %15 = sbr.rel target = $region3
    $region8: #{hopfield_forward.1} parent=1 // loop_exit
      _
    %671 = vsyncpa [#allocation3], 1
    %s672 = scalar_lea.sflag [#allocation3], 1
    %673 = vsyncpa %s672, 1
    %674 = vsyncpa [#allocation6], 1
    %675 = vsyncpa [#allocation4], 1
    %s676 = scalar_lea.sflag [#allocation4], 1
    %677 = vsyncpa %s676, 1

</llo_original>
